<compile_context>
chip_gen: v7x
topology: tpu7x:2x2x1
jax: 0.10.0
libtpu: 0.0.40
codegen_flags: <defaults>
</compile_context>

<pallas_src>
import functools

import jax
import jax.numpy as jnp
from jax.experimental import pallas as pl
from jax.experimental.pallas import tpu as pltpu

NTRIALS = 4
_LANE = 128
_VMEM_BUDGET = 16 * 1024 * 1024     # tile-sizing budget (headroom on v7x's 64 MiB)
_VMEM_LIMIT = 32 * 1024 * 1024      # scoped VMEM limit, valid on v5e/v6e/v7x


def _round_up(x, m):
    return (x + m - 1) // m * m


def _row_tile(n_rows, bytes_per_row):
    """Largest row tile that divides n_rows, is a multiple of 8 (or == n_rows),
    and keeps the double-buffered pipeline inside the VMEM budget."""
    cap = max(1, _VMEM_BUDGET // max(1, bytes_per_row))
    if n_rows <= cap:
        return n_rows
    t = min(cap, n_rows)
    t -= t % 8
    while t >= 8 and n_rows % t:
        t -= 8
    return t if t >= 8 else n_rows


# ----------------------------------------------------------------------------
# Maxup.forward : augment ntrials times and concatenate along batch dim.
# ----------------------------------------------------------------------------
def _augment_kernel(x_ref, o_ref):
    # x_ref: (tile_n, D) ; o_ref: (ntrials, tile_n, D)  — one read, T writes.
    ntrials = o_ref.shape[0]
    x = x_ref[...]
    for t in range(ntrials):                       # unrolled, T is tiny & static
        scale = 1.0 + 0.05 * t                     # deterministic per-trial affine
        shift = 0.01 * t
        o_ref[t] = (x * scale + shift).astype(o_ref.dtype)


def maxup_forward(x, y, ntrials=NTRIALS):
    """Maxup.forward: augment `ntrials` times, cat along batch (trial-major)."""
    # TODO(synk): the real augmentation module is user-supplied in PyTorch; a
    # deterministic per-trial affine stand-in is used here.  Fusing it into the
    # downstream consumer (first matmul) would remove the T*|x| HBM round-trip.
    N, C, H, W = x.shape
    D = C * H * W
    x2d = x.reshape(N, D)                          # lane-dense: D % 128 == 0 here

    itemsize = jnp.dtype(x.dtype).itemsize
    # double-buffered input + double-buffered T output slabs per row
    tile_n = _row_tile(N, D * itemsize * 2 * (1 + ntrials))

    aug = pl.pallas_call(
        _augment_kernel,
        out_shape=jax.ShapeDtypeStruct((ntrials, N, D), x.dtype),
        grid=(N // tile_n,),
        in_specs=[pl.BlockSpec((tile_n, D), lambda i: (i, 0))],
        out_specs=pl.BlockSpec((ntrials, tile_n, D), lambda i: (0, i, 0)),
        compiler_params=pltpu.CompilerParams(
            dimension_semantics=("parallel",),
            vmem_limit_bytes=_VMEM_LIMIT),
    )(x2d)

    # torch.cat(additional_x, dim=0)  (trial-major order) — free reshapes.
    x_cat = aug.reshape(ntrials * N, C, H, W)
    y_cat = jnp.concatenate([y] * ntrials, axis=0)
    return x_cat, y_cat


# ----------------------------------------------------------------------------
# Maxup.maxup_loss : per-sample CE -> view(B, ntrials, -1) -> max over trials
#                    -> mean ; plus argmax accuracy count / ntrials.
# ----------------------------------------------------------------------------
def _maxup_loss_kernel(logits_ref, labels_ref, loss_ref, correct_ref, *,
                       ntrials, cp, batch_groups):
    # logits_ref: (tile_b, ntrials*cp) native dtype — one max-group per row.
    # labels_ref: (tile_b, ntrials) int32.
    # loss_ref / correct_ref: (1, 1) f32 resident accumulators.
    i = pl.program_id(0)

    @pl.when(i == 0)
    def _init():
        loss_ref[...] = jnp.zeros_like(loss_ref)
        correct_ref[...] = jnp.zeros_like(correct_ref)

    tile_b = logits_ref.shape[0]
    cls = jax.lax.broadcasted_iota(jnp.int32, (tile_b, cp), 1)

    group_max = None          # (tile_b, 1) worst-case CE per group
    n_correct = None          # (tile_b, 1) correct-prediction count per group
    for t in range(ntrials):                       # unrolled, static T
        lg = logits_ref[:, pl.ds(t * cp, cp)].astype(jnp.float32)   # (tile_b, cp)
        lab = labels_ref[:, pl.ds(t, 1)]                            # (tile_b, 1)

        # cross entropy: lse(logits) - logits[label]
        m = jnp.max(lg, axis=-1, keepdims=True)                     # (tile_b, 1)
        lse = m + jnp.log(jnp.sum(jnp.exp(lg - m), axis=-1, keepdims=True))
        picked = jnp.sum(jnp.where(cls == lab, lg, 0.0), axis=-1, keepdims=True)
        ce = lse - picked                                           # (tile_b, 1)

        # accuracy: first-max index == label
        pred = jnp.min(jnp.where(lg == m, cls, cp), axis=-1, keepdims=True)
        ok = (pred == lab).astype(jnp.float32)                      # (tile_b, 1)

        group_max = ce if group_max is None else jnp.maximum(group_max, ce)
        n_correct = ok if n_correct is None else n_correct + ok

    loss_ref[...] += jnp.sum(group_max, axis=0, keepdims=True)
    correct_ref[...] += jnp.sum(n_correct, axis=0, keepdims=True)

    @pl.when(i == pl.num_programs(0) - 1)
    def _finalize():
        loss_ref[...] = loss_ref[...] / jnp.float32(batch_groups)
        correct_ref[...] = correct_ref[...] / jnp.float32(ntrials)


def maxup_loss(outputs, extra_labels, ntrials=NTRIALS):
    """Maxup.maxup_loss: worst-case CE over trial groups + accuracy count."""
    N, C = outputs.shape
    B = N // ntrials

    # Pad the class dim to a lane multiple with a very negative value so that
    # max / LSE / argmax are unaffected.  Keep the native dtype (cast in-kernel).
    Cp = _round_up(C, _LANE)
    if Cp != C:
        neg = jnp.finfo(outputs.dtype).min
        outputs = jnp.pad(outputs, ((0, 0), (0, Cp - C)), constant_values=neg)

    # Exactly torch's .view(batch_size, ntrials, -1) grouping: consecutive rows
    # form a group; lay each group out as one lane-dense row of ntrials*Cp.
    logits2d = outputs.reshape(B, ntrials * Cp)
    labels2d = extra_labels.astype(jnp.int32).reshape(B, ntrials)

    itemsize = jnp.dtype(outputs.dtype).itemsize
    bytes_per_row = 2 * (ntrials * Cp * itemsize + _LANE * 4)   # dbl-buffered in
    tile_b = _row_tile(B, bytes_per_row)

    kernel = functools.partial(_maxup_loss_kernel,
                               ntrials=ntrials, cp=Cp, batch_groups=B)
    loss, correct = pl.pallas_call(
        kernel,
        out_shape=(jax.ShapeDtypeStruct((1, 1), jnp.float32),
                   jax.ShapeDtypeStruct((1, 1), jnp.float32)),
        grid=(B // tile_b,),
        in_specs=[pl.BlockSpec((tile_b, ntrials * Cp), lambda i: (i, 0)),
                  pl.BlockSpec((tile_b, ntrials), lambda i: (i, 0))],
        out_specs=(pl.BlockSpec((1, 1), lambda i: (0, 0)),
                   pl.BlockSpec((1, 1), lambda i: (0, 0))),
        compiler_params=pltpu.CompilerParams(
            dimension_semantics=("arbitrary",),   # outputs accumulate across grid
            vmem_limit_bytes=_VMEM_LIMIT),
    )(logits2d, labels2d)
    return loss[0, 0], correct[0, 0]


# ----------------------------------------------------------------------------
# pure-JAX references (for sanity check)
# ----------------------------------------------------------------------------
def _ref_maxup_loss(outputs, labels, ntrials=NTRIALS):
    N, C = outputs.shape
    B = N // ntrials
    lse = jax.nn.logsumexp(outputs, axis=-1)
    ce = lse - jnp.take_along_axis(outputs, labels[:, None], axis=1)[:, 0]
    loss = jnp.max(ce.reshape(B, ntrials, 1), axis=1).mean()
    correct = (jnp.argmax(outputs, axis=1) == labels).sum() / ntrials
    return loss, correct


if __name__ == "__main__":
    key = jax.random.PRNGKey(0)
    k_x, k_y, k_w = jax.random.split(key, 3)

    batch, channels, H, W = 2, 4, 16, 16
    num_classes = 32

    x = jax.random.normal(k_x, (batch, channels, H, W), dtype=jnp.float32)
    y = jax.random.randint(k_y, (batch,), 0, num_classes, dtype=jnp.int32)

    # Maxup.forward: augmented batch + replicated labels.
    x_aug, y_aug = maxup_forward(x, y)
    jax.block_until_ready(x_aug)

    # Check the augmentation against the pure-JAX per-trial affine + cat(dim=0).
    ref_aug = jnp.concatenate(
        [x * (1.0 + 0.05 * t) + 0.01 * t for t in range(NTRIALS)], axis=0)
    assert jnp.allclose(x_aug, ref_aug, rtol=1e-5, atol=1e-5)
    assert jnp.array_equal(y_aug, jnp.concatenate([y] * NTRIALS, axis=0))

    # Tiny deterministic linear "model" (glue) producing logits for the loss.
    w_proj = jax.random.normal(k_w, (channels * H * W, num_classes),
                               dtype=jnp.float32) * 0.02
    outputs = x_aug.reshape(x_aug.shape[0], -1) @ w_proj   # (ntrials*batch, C)

    # Maxup.maxup_loss in Pallas.
    loss, correct = maxup_loss(outputs, y_aug)
    jax.block_until_ready((loss, correct))

    # Sanity check vs pure-JAX reference.
    ref_loss, ref_correct = _ref_maxup_loss(outputs, y_aug)
    assert jnp.allclose(loss, ref_loss, rtol=1e-3, atol=1e-3), (loss, ref_loss)
    assert jnp.allclose(correct, jnp.float32(ref_correct), rtol=1e-3, atol=1e-3)

    print("KERNEL_OK")
</pallas_src>

<mosaic_0001>
module attributes {stable_mosaic.version = 11 : i64} {
  func.func @_augment_kernel(%arg0: i32, %arg1: memref<2x1024xf32, #tpu.memory_space<vmem>>, %arg2: memref<4x2x1024xf32, #tpu.memory_space<vmem>>) attributes {dimension_semantics = [#tpu.dimension_semantics<parallel>], iteration_bounds = array<i64: 1>, scalar_prefetch = 0 : i64, scratch_operands = 0 : i64, tpu.core_type = #tpu.core_type<tc>, window_params = [{transform_indices = @transform_0, window_bounds = array<i64: 2, 1024>}, {transform_indices = @transform_1, window_bounds = array<i64: 4, 2, 1024>}]} {
    %c0 = arith.constant 0 : index
    %c0_0 = arith.constant 0 : index
    %0 = vector.load %arg1[%c0, %c0_0] : memref<2x1024xf32, #tpu.memory_space<vmem>>, vector<2x1024xf32>
    %cst = arith.constant 1.000000e+00 : f32
    %1 = vector.broadcast %cst : f32 to vector<2x1024xf32>
    %2 = arith.mulf %0, %1 : vector<2x1024xf32>
    %cst_1 = arith.constant 0.000000e+00 : f32
    %3 = vector.broadcast %cst_1 : f32 to vector<2x1024xf32>
    %4 = arith.addf %2, %3 : vector<2x1024xf32>
    %c0_2 = arith.constant 0 : index
    %c0_3 = arith.constant 0 : index
    %c0_4 = arith.constant 0 : index
    %5 = vector.load %arg2[%c0_2, %c0_3, %c0_4] : memref<4x2x1024xf32, #tpu.memory_space<vmem>>, vector<1x2x1024xf32>
    %6 = vector.shape_cast %5 : vector<1x2x1024xf32> to vector<2x1024xf32>
    %7 = vector.shape_cast %4 : vector<2x1024xf32> to vector<1x2x1024xf32>
    tpu.vector_store %arg2[%c0_2, %c0_3, %c0_4], %7 {strides = array<i32>} : memref<4x2x1024xf32, #tpu.memory_space<vmem>>, vector<1x2x1024xf32>,
    %cst_5 = arith.constant 1.050000e+00 : f32
    %8 = vector.broadcast %cst_5 : f32 to vector<2x1024xf32>
    %9 = arith.mulf %0, %8 : vector<2x1024xf32>
    %cst_6 = arith.constant 0.00999999977 : f32
    %10 = vector.broadcast %cst_6 : f32 to vector<2x1024xf32>
    %11 = arith.addf %9, %10 : vector<2x1024xf32>
    %c1 = arith.constant 1 : index
    %c0_7 = arith.constant 0 : index
    %c0_8 = arith.constant 0 : index
    %12 = vector.load %arg2[%c1, %c0_7, %c0_8] : memref<4x2x1024xf32, #tpu.memory_space<vmem>>, vector<1x2x1024xf32>
    %13 = vector.shape_cast %12 : vector<1x2x1024xf32> to vector<2x1024xf32>
    %14 = vector.shape_cast %11 : vector<2x1024xf32> to vector<1x2x1024xf32>
    tpu.vector_store %arg2[%c1, %c0_7, %c0_8], %14 {strides = array<i32>} : memref<4x2x1024xf32, #tpu.memory_space<vmem>>, vector<1x2x1024xf32>,
    %cst_9 = arith.constant 1.100000e+00 : f32
    %15 = vector.broadcast %cst_9 : f32 to vector<2x1024xf32>
    %16 = arith.mulf %0, %15 : vector<2x1024xf32>
    %cst_10 = arith.constant 2.000000e-02 : f32
    %17 = vector.broadcast %cst_10 : f32 to vector<2x1024xf32>
    %18 = arith.addf %16, %17 : vector<2x1024xf32>
    %c2 = arith.constant 2 : index
    %c0_11 = arith.constant 0 : index
    %c0_12 = arith.constant 0 : index
    %19 = vector.load %arg2[%c2, %c0_11, %c0_12] : memref<4x2x1024xf32, #tpu.memory_space<vmem>>, vector<1x2x1024xf32>
    %20 = vector.shape_cast %19 : vector<1x2x1024xf32> to vector<2x1024xf32>
    %21 = vector.shape_cast %18 : vector<2x1024xf32> to vector<1x2x1024xf32>
    tpu.vector_store %arg2[%c2, %c0_11, %c0_12], %21 {strides = array<i32>} : memref<4x2x1024xf32, #tpu.memory_space<vmem>>, vector<1x2x1024xf32>,
    %cst_13 = arith.constant 1.150000e+00 : f32
    %22 = vector.broadcast %cst_13 : f32 to vector<2x1024xf32>
    %23 = arith.mulf %0, %22 : vector<2x1024xf32>
    %cst_14 = arith.constant 3.000000e-02 : f32
    %24 = vector.broadcast %cst_14 : f32 to vector<2x1024xf32>
    %25 = arith.addf %23, %24 : vector<2x1024xf32>
    %c3 = arith.constant 3 : index
    %c0_15 = arith.constant 0 : index
    %c0_16 = arith.constant 0 : index
    %26 = vector.load %arg2[%c3, %c0_15, %c0_16] : memref<4x2x1024xf32, #tpu.memory_space<vmem>>, vector<1x2x1024xf32>
    %27 = vector.shape_cast %26 : vector<1x2x1024xf32> to vector<2x1024xf32>
    %28 = vector.shape_cast %25 : vector<2x1024xf32> to vector<1x2x1024xf32>
    tpu.vector_store %arg2[%c3, %c0_15, %c0_16], %28 {strides = array<i32>} : memref<4x2x1024xf32, #tpu.memory_space<vmem>>, vector<1x2x1024xf32>,
    return
  }
  func.func @transform_0(%arg0: i32) -> (i32, i32) {
    %c0_i32 = arith.constant 0 : i32
    %c0_i32_0 = arith.constant 0 : i32
    return %arg0, %c0_i32 : i32, i32
  }
  func.func @transform_1(%arg0: i32) -> (i32, i32, i32) {
    %c0_i32 = arith.constant 0 : i32
    %c0_i32_0 = arith.constant 0 : i32
    %c0_i32_1 = arith.constant 0 : i32
    return %c0_i32, %arg0, %c0_i32_0 : i32, i32, i32
  }
}

</mosaic_0001>

<llo_original>
// kernel: tpu_custom_call.1
$region0: #{tpu_custom_call.1}
  #allocation0 [shape = 'u32[]', space=smem, size = 0x4, offset = 0x4, fixed_abs, tag = 'smem constant byte address 0x4 - core index']
  #allocation1 [shape = 'u32[144,128]{1,0:T(1,128)}', space=vmem, size = 0x12000, scoped, tag = 'internal scratch']
  %s0 = inlined_call_operand.hbm [shape: f32[2,1024], index: 0, kind: input, shape index: {}]
  %s1 = inlined_call_operand.hbm [shape: f32[4,2,1024], index: 1, kind: output, shape index: {}]
  %s2 = sld [smem:[#allocation0]]
  $region18: #{tpu_custom_call.1} parent=0
    _
  %s4 = ssub.s32 1, %s2
  %s5 = scalar_select 0, %s4, %s2
  $region1: #{tpu_custom_call.1} parent=0
    #allocation2 [shape = 'u8[8192]{0}', space=vmem, size = 0x2000, scoped, tag = 'input window, operand 0, single buffered']
    #allocation3 [shape = 's32[1]{0}', space=sflag, size = 0x4, scoped, tag = 'scoped memory for tpu_custom_call.1']
    #allocation4 [shape = 's32[1]{0}', space=sflag, size = 0x4, scoped, tag = 'scoped memory for tpu_custom_call.1']
    #allocation5 [shape = 'u8[32768]{0}', space=vmem, size = 0x8000, scoped, tag = 'output window, operand 0, single buffered']
    %6 = vsyncpa [#allocation3], 0
    %7 = vsyncpa [#allocation4], 0
    // Predicated region
    $region2: #{tpu_custom_call.1} parent=1 // pred_check
      _
    $region3: #{tpu_custom_call.1} parent=1 // pred_check_branch
      %9 = sbr.rel (0) target = $region5
    $region4: #{tpu_custom_call.1} parent=1 // pred_region
      %s11 = ssub.s32 256, 256
      %12 = vsyncadd [#allocation3], %s11
      %s14 = sshll.u32 [#allocation2], 4
      %s15 = int_to_ptr.vmem [resolvable:$true] %s14
      %17 = dma.hbm_to_vmem [thread:$0]  %s0, 256, %s15, [#allocation3]
    $region5: #{tpu_custom_call.1} parent=1 // pred_fallthru
      _
    // Predicated region
    $region6: #{tpu_custom_call.1} parent=1 // pred_check
      _
    $region7: #{tpu_custom_call.1} parent=1 // pred_check_branch
      %19 = sbr.rel (0) target = $region9
    $region8: #{tpu_custom_call.1} parent=1 // pred_region
      %20 = dma.done [#allocation3], 256
    $region9: #{tpu_custom_call.1} parent=1 // pred_fallthru
      _
    %v21 = vld [vmem:[#allocation2] sm:$0xff]
    %v22 = vld [vmem:[#allocation2 + $0x8] sm:$0xff]
    %v23 = vadd.f32 %v21, 0.0
    %v24 = vadd.f32 %v22, 0.0
    %25 = vst [vmem:[#allocation5] sm:$0xff] %v23
    %26 = vst [vmem:[#allocation5 + $0x8] sm:$0xff] %v24
    %v27 = vmul.f32 %v21, 1.05
    %v28 = vmul.f32 %v22, 1.05
    %v29 = vadd.f32 %v27, 0.01
    %v30 = vadd.f32 %v28, 0.01
    %s31 = scalar_lea.vmem [#allocation5], 16
    %32 = vst [vmem:[%s31] sm:$0xff] %v29
    %33 = vst [vmem:[%s31 + $0x8] sm:$0xff] %v30
    %v34 = vmul.f32 %v21, 1.1
    %v35 = vmul.f32 %v22, 1.1
    %v36 = vadd.f32 %v34, 0.02
    %v37 = vadd.f32 %v35, 0.02
    %s38 = scalar_lea.vmem [#allocation5], 32
    %39 = vst [vmem:[%s38] sm:$0xff] %v36
    %40 = vst [vmem:[%s38 + $0x8] sm:$0xff] %v37
    %v41 = vmul.f32 %v21, 1.15
    %v42 = vmul.f32 %v22, 1.15
    %v43 = vadd.f32 %v41, 0.03
    %v44 = vadd.f32 %v42, 0.03
    %s45 = scalar_lea.vmem [#allocation5], 48
    %46 = vst [vmem:[%s45] sm:$0xff] %v43
    %47 = vst [vmem:[%s45 + $0x8] sm:$0xff] %v44
    // Predicated region
    $region10: #{tpu_custom_call.1} parent=1 // pred_check
      _
    $region11: #{tpu_custom_call.1} parent=1 // pred_check_branch
      %49 = sbr.rel (0) target = $region13
    $region12: #{tpu_custom_call.1} parent=1 // pred_region
      %s51 = ssub.s32 1024, 1024
      %52 = vsyncadd [#allocation4], %s51
      %s53 = sshll.u32 [#allocation5], 4
      %s54 = int_to_ptr.vmem [resolvable:$true] %s53
      %59 = dma.vmem_to_hbm [thread:$0]  %s54, 1024, %s1, [#allocation4], 256, 256, 16
    $region13: #{tpu_custom_call.1} parent=1 // pred_fallthru
      _
    // Predicated region
    $region14: #{tpu_custom_call.1} parent=1 // pred_check
      _
    $region15: #{tpu_custom_call.1} parent=1 // pred_check_branch
      %61 = sbr.rel (0) target = $region17
    $region16: #{tpu_custom_call.1} parent=1 // pred_region
      %62 = dma.done [#allocation4], 1024
    $region17: #{tpu_custom_call.1} parent=1 // pred_fallthru
      _
    %63 = vsyncpa [#allocation3], 1
    %64 = vsyncpa [#allocation4], 1

</llo_original>
